<compile_context>
chip_gen: v7x
topology: tpu7x:2x2x1
jax: 0.10.0
libtpu: 0.0.40
codegen_flags: <defaults>
</compile_context>

<pallas_src>
import jax
import jax.numpy as jnp
from jax.experimental import pallas as pl
from jax.experimental.pallas import tpu as pltpu


_TARGET_STEPS = 8          # >= 2-4 grid steps per TensorCore (v7x has 2 TCs)
_MIN_STEP_BYTES = 1 << 20  # do not split per-step DMAs below ~1 MiB
_VMEM_HEADROOM = 4 << 20   # headroom for Mosaic internal scratch


def _round_up(a: int, m: int) -> int:
    return -(-a // m) * m


def _sublane_pack(itemsize: int) -> int:
    # 8 sublanes of 32 bit; sub-32-bit dtypes pack along sublanes.
    return 8 * max(1, 4 // itemsize)


def _vmem_limit_bytes() -> int:
    """Generation-gated scoped-VMEM limit: half of physical VMEM
    (v5e/v6e: 128 MiB -> 64 MiB, v7x: 64 MiB -> 32 MiB)."""
    cap = 64 << 20  # conservative fallback = v7x per-core physical VMEM
    try:
        cap = int(getattr(pltpu.get_tpu_info(), "vmem_capacity_bytes", cap))
    except Exception:
        pass
    return max(16 << 20, min(64 << 20, cap // 2))


def _shrink_to_divisor(full: int, cur: int, unit: int):
    """Largest divisor of `full` strictly below `cur` that is a multiple of
    `unit` (any divisor when unit == 1).  None if there is no such divisor.
    Keeps block shapes tileable: the second-minor / minor block dims stay a
    multiple of the sublane pack / 128, or equal to the full array dim."""
    for d in range(cur - 1, 0, -1):
        if full % d == 0 and (unit == 1 or d % unit == 0):
            return d
    return None


# --------------------------------------------------------------------------
# Path 1: lane-split layout (hw % 128 == 0), shuffle done by the index_maps.
# --------------------------------------------------------------------------
def _copy_kernel(x_ref, o_ref):
    # The permutation is expressed by the in/out index_maps; both refs are
    # (b_blk, cg_blk, L_blk, 128), so every vld/vst is a dense whole-tile op.
    o_ref[...] = x_ref[...]


def _choose_blocks_lane_split(b, groups, cg, L, itemsize, budget):
    sub = _sublane_pack(itemsize)

    def step_bytes(bb, cb, lb):  # one input block + one output block (padded)
        return 2 * bb * cb * _round_up(lb, sub) * 128 * itemsize

    def n_steps(bb, cb, lb):
        return (b // bb) * groups * (cg // cb) * (L // lb)

    b_blk, cg_blk, L_blk = b, cg, L
    # (1) fit: double-buffered in+out blocks inside the scoped-VMEM budget
    while 2 * step_bytes(b_blk, cg_blk, L_blk) > budget:
        nb = _shrink_to_divisor(b, b_blk, 1)
        nc = _shrink_to_divisor(cg, cg_blk, 1)     # cg is a leading dim here
        nl = _shrink_to_divisor(L, L_blk, sub)
        if nb is not None:
            b_blk = nb
        elif nc is not None:
            cg_blk = nc
        elif nl is not None:
            L_blk = nl
        else:
            break
    # (2) depth: enough grid steps for DMA/compute overlap (and both v7x TCs)
    while (n_steps(b_blk, cg_blk, L_blk) < _TARGET_STEPS
           and step_bytes(b_blk, cg_blk, L_blk) > 2 * _MIN_STEP_BYTES):
        nb = _shrink_to_divisor(b, b_blk, 1)
        nc = _shrink_to_divisor(cg, cg_blk, 1)
        if nb is not None:
            b_blk = nb
        elif nc is not None:
            cg_blk = nc
        else:
            break
    return b_blk, cg_blk, L_blk


# --------------------------------------------------------------------------
# Path 2: general hw — store-contiguous in-kernel shuffle.
# --------------------------------------------------------------------------
def _make_shuffle_kernel(cg_blk):
    def kernel(x_ref, o_ref):
        # x_ref: (b_blk, G, cg_blk, HW); o_ref: (b_blk, cg_blk, G, HW)
        # Store-contiguous loop: each iteration writes a full (G, HW) trailing
        # slab (dense in lanes) — never single-sublane masked stores on the
        # scarce vst slot.  Reads are strided but vld slots are more plentiful.
        for j in range(cg_blk):
            o_ref[:, j, :, :] = x_ref[:, :, j, :]
    return kernel


def _choose_blocks_flat(b, groups, cg, hw, itemsize, budget):
    sub = _sublane_pack(itemsize)
    lane = _round_up(hw, 128)

    def step_bytes(bb, cb):  # padded input block + padded output block
        in_blk = bb * groups * _round_up(cb, sub) * lane * itemsize
        out_blk = bb * cb * _round_up(groups, sub) * lane * itemsize
        return in_blk + out_blk

    def n_steps(bb, cb):
        return (b // bb) * (cg // cb)

    b_blk, cg_blk = b, cg
    # (1) fit
    while 2 * step_bytes(b_blk, cg_blk) > budget:
        nb = _shrink_to_divisor(b, b_blk, 1)
        nc = _shrink_to_divisor(cg, cg_blk, sub)   # keep second-minor tileable
        if nb is not None:
            b_blk = nb
        elif nc is not None:
            cg_blk = nc
        else:
            break
    # (2) depth
    while (n_steps(b_blk, cg_blk) < _TARGET_STEPS
           and step_bytes(b_blk, cg_blk) > 2 * _MIN_STEP_BYTES):
        nb = _shrink_to_divisor(b, b_blk, 1)
        nc = _shrink_to_divisor(cg, cg_blk, sub)
        if nb is not None:
            b_blk = nb
        elif nc is not None:
            cg_blk = nc
        else:
            break
    # (3) keep the unrolled copy loop bounded (compile time) for huge CG,
    #     without letting the per-step DMA collapse.
    while cg_blk > 64:
        cand = _shrink_to_divisor(cg, cg_blk, sub)
        if cand is None or step_bytes(b_blk, cand) < _MIN_STEP_BYTES:
            break
        cg_blk = cand
    return b_blk, cg_blk


# --------------------------------------------------------------------------
# Public entry point.
# --------------------------------------------------------------------------
def channel_shuffle(x: jax.Array, groups: int) -> jax.Array:
    """Pallas TPU implementation of ChannelShuffle(groups).forward(x); NCHW."""
    b, c, h, w = x.shape
    if c % groups != 0:
        raise ValueError(f"channels ({c}) must be divisible by groups ({groups})")
    cg = c // groups
    hw = h * w
    if groups == 1 or cg == 1:
        return x  # identity permutation

    itemsize = jnp.dtype(x.dtype).itemsize
    sub = _sublane_pack(itemsize)
    vmem_limit = _vmem_limit_bytes()
    budget = max(vmem_limit - _VMEM_HEADROOM, 2 << 20)

    if hw % 128 == 0 and (hw // 128) >= sub:
        # ---- Path 1: lane-split layout, permutation in the index_maps ----
        L = hw // 128
        b_blk, cg_blk, L_blk = _choose_blocks_lane_split(
            b, groups, cg, L, itemsize, budget)
        x5 = x.reshape(b, groups, cg, L, 128)          # free, row-major view
        grid = (b // b_blk, groups, cg // cg_blk, L // L_blk)
        out5 = pl.pallas_call(
            _copy_kernel,
            out_shape=jax.ShapeDtypeStruct((b, cg, groups, L, 128), x.dtype),
            grid=grid,
            in_specs=[pl.BlockSpec((b_blk, None, cg_blk, L_blk, 128),
                                   lambda i, g, k, m: (i, g, k, m, 0))],
            out_specs=pl.BlockSpec((b_blk, cg_blk, None, L_blk, 128),
                                   lambda i, g, k, m: (i, k, g, m, 0)),
            compiler_params=pltpu.CompilerParams(
                dimension_semantics=("parallel",) * 4,
                vmem_limit_bytes=vmem_limit),
        )(x5)
        return out5.reshape(b, c, h, w)

    # ---- Path 2: general hw, batch+CG-chunked blocks, in-kernel shuffle ----
    b_blk, cg_blk = _choose_blocks_flat(b, groups, cg, hw, itemsize, budget)
    x4 = x.reshape(b, groups, cg, hw)                  # free, row-major view
    grid = (b // b_blk, cg // cg_blk)
    out4 = pl.pallas_call(
        _make_shuffle_kernel(cg_blk),
        out_shape=jax.ShapeDtypeStruct((b, cg, groups, hw), x.dtype),
        grid=grid,
        in_specs=[pl.BlockSpec((b_blk, groups, cg_blk, hw),
                               lambda i, k: (i, 0, k, 0))],
        out_specs=pl.BlockSpec((b_blk, cg_blk, groups, hw),
                               lambda i, k: (i, k, 0, 0)),
        compiler_params=pltpu.CompilerParams(
            dimension_semantics=("parallel",) * 2,
            vmem_limit_bytes=vmem_limit),
    )(x4)
    return out4.reshape(b, c, h, w)


def channel_shuffle_ref(x: jax.Array, groups: int) -> jax.Array:
    """Pure-JAX reference mirroring the PyTorch forward."""
    b, c, h, w = x.shape
    cg = c // groups
    y = x.reshape(b, groups, cg, h, w)
    y = jnp.transpose(y, (0, 2, 1, 3, 4))
    return y.reshape(b, c, h, w)


if __name__ == "__main__":
    key = jax.random.PRNGKey(0)

    # Case 1: module-spec-sized input (ctor arg == group count) -> Path 2.
    b, c, h, w = 2, 4, 16, 16
    groups = 2
    x = jax.random.normal(key, (b, c, h, w), dtype=jnp.float32)
    out = jax.block_until_ready(channel_shuffle(x, groups))
    ref = channel_shuffle_ref(x, groups)
    assert out.shape == ref.shape and out.dtype == ref.dtype
    assert jnp.array_equal(out, ref), "Pallas ChannelShuffle mismatch (case 1)"

    # Case 2: groups > channels-per-group, non-square spatial -> Path 2.
    x2 = jax.random.normal(jax.random.fold_in(key, 1), (2, 6, 16, 8),
                           dtype=jnp.float32)
    out2 = jax.block_until_ready(channel_shuffle(x2, 3))
    assert jnp.array_equal(out2, channel_shuffle_ref(x2, 3)), \
        "Pallas ChannelShuffle mismatch (case 2)"

    # Case 3: hw % (128*sublane pack) == 0 -> Path 1 (lane-split layout).
    x3 = jax.random.normal(jax.random.fold_in(key, 2), (2, 8, 32, 32),
                           dtype=jnp.float32)
    out3 = jax.block_until_ready(channel_shuffle(x3, 4))
    assert jnp.array_equal(out3, channel_shuffle_ref(x3, 4)), \
        "Pallas ChannelShuffle mismatch (case 3)"

    print("KERNEL_OK")
</pallas_src>

<mosaic_0001>
module attributes {stable_mosaic.version = 11 : i64} {
  func.func @kernel(%arg0: i32, %arg1: i32, %arg2: memref<2x2x2x256xf32, #tpu.memory_space<vmem>>, %arg3: memref<2x2x2x256xf32, #tpu.memory_space<vmem>>) attributes {dimension_semantics = [#tpu.dimension_semantics<parallel>, #tpu.dimension_semantics<parallel>], iteration_bounds = array<i64: 1, 1>, scalar_prefetch = 0 : i64, scratch_operands = 0 : i64, tpu.core_type = #tpu.core_type<tc>, window_params = [{transform_indices = @transform_0, window_bounds = array<i64: 2, 2, 2, 256>}, {transform_indices = @transform_1, window_bounds = array<i64: 2, 2, 2, 256>}]} {
    %c0 = arith.constant 0 : index
    %c0_0 = arith.constant 0 : index
    %c0_1 = arith.constant 0 : index
    %c0_2 = arith.constant 0 : index
    %0 = vector.load %arg2[%c0, %c0_0, %c0_1, %c0_2] : memref<2x2x2x256xf32, #tpu.memory_space<vmem>>, vector<2x2x1x256xf32>
    %1 = vector.shape_cast %0 : vector<2x2x1x256xf32> to vector<2x2x256xf32>
    %c0_3 = arith.constant 0 : index
    %c0_4 = arith.constant 0 : index
    %c0_5 = arith.constant 0 : index
    %c0_6 = arith.constant 0 : index
    %2 = vector.load %arg3[%c0_3, %c0_4, %c0_5, %c0_6] : memref<2x2x2x256xf32, #tpu.memory_space<vmem>>, vector<2x1x2x256xf32>
    %3 = vector.shape_cast %2 : vector<2x1x2x256xf32> to vector<2x2x256xf32>
    %4 = vector.shape_cast %1 : vector<2x2x256xf32> to vector<2x1x2x256xf32>
    tpu.vector_store %arg3[%c0_3, %c0_4, %c0_5, %c0_6], %4 {strides = array<i32>} : memref<2x2x2x256xf32, #tpu.memory_space<vmem>>, vector<2x1x2x256xf32>,
    %c0_7 = arith.constant 0 : index
    %c0_8 = arith.constant 0 : index
    %c1 = arith.constant 1 : index
    %c0_9 = arith.constant 0 : index
    %5 = vector.load %arg2[%c0_7, %c0_8, %c1, %c0_9] : memref<2x2x2x256xf32, #tpu.memory_space<vmem>>, vector<2x2x1x256xf32>
    %6 = vector.shape_cast %5 : vector<2x2x1x256xf32> to vector<2x2x256xf32>
    %c0_10 = arith.constant 0 : index
    %c1_11 = arith.constant 1 : index
    %c0_12 = arith.constant 0 : index
    %c0_13 = arith.constant 0 : index
    %7 = vector.load %arg3[%c0_10, %c1_11, %c0_12, %c0_13] : memref<2x2x2x256xf32, #tpu.memory_space<vmem>>, vector<2x1x2x256xf32>
    %8 = vector.shape_cast %7 : vector<2x1x2x256xf32> to vector<2x2x256xf32>
    %9 = vector.shape_cast %6 : vector<2x2x256xf32> to vector<2x1x2x256xf32>
    tpu.vector_store %arg3[%c0_10, %c1_11, %c0_12, %c0_13], %9 {strides = array<i32>} : memref<2x2x2x256xf32, #tpu.memory_space<vmem>>, vector<2x1x2x256xf32>,
    return
  }
  func.func @transform_0(%arg0: i32, %arg1: i32) -> (i32, i32, i32, i32) {
    %c0_i32 = arith.constant 0 : i32
    %c0_i32_0 = arith.constant 0 : i32
    %c0_i32_1 = arith.constant 0 : i32
    return %arg0, %c0_i32, %arg1, %c0_i32_0 : i32, i32, i32, i32
  }
  func.func @transform_1(%arg0: i32, %arg1: i32) -> (i32, i32, i32, i32) {
    %c0_i32 = arith.constant 0 : i32
    %c0_i32_0 = arith.constant 0 : i32
    %c0_i32_1 = arith.constant 0 : i32
    return %arg0, %arg1, %c0_i32, %c0_i32_0 : i32, i32, i32, i32
  }
}

</mosaic_0001>

<llo_original>
// kernel: tpu_custom_call.1
$region0: #{tpu_custom_call.1}
  #allocation0 [shape = 'u32[]', space=smem, size = 0x4, offset = 0x4, fixed_abs, tag = 'smem constant byte address 0x4 - core index']
  #allocation1 [shape = 'u32[144,128]{1,0:T(1,128)}', space=vmem, size = 0x12000, scoped, tag = 'internal scratch']
  %s0 = inlined_call_operand.hbm [shape: f32[2,2,2,256], index: 0, kind: input, shape index: {}]
  %s1 = inlined_call_operand.hbm [shape: f32[2,2,2,256], index: 1, kind: output, shape index: {}]
  %s2 = sld [smem:[#allocation0]]
  $region18: #{tpu_custom_call.1} parent=0
    _
  %s4 = ssub.s32 1, %s2
  %s5 = scalar_select 0, %s4, %s2
  $region1: #{tpu_custom_call.1} parent=0
    #allocation2 [shape = 'u8[8192]{0}', space=vmem, size = 0x2000, scoped, tag = 'input window, operand 0, single buffered']
    #allocation3 [shape = 's32[1]{0}', space=sflag, size = 0x4, scoped, tag = 'scoped memory for tpu_custom_call.1']
    #allocation4 [shape = 's32[1]{0}', space=sflag, size = 0x4, scoped, tag = 'scoped memory for tpu_custom_call.1']
    #allocation5 [shape = 'u8[8192]{0}', space=vmem, size = 0x2000, scoped, tag = 'output window, operand 0, single buffered']
    %6 = vsyncpa [#allocation3], 0
    %7 = vsyncpa [#allocation4], 0
    // Predicated region
    $region2: #{tpu_custom_call.1} parent=1 // pred_check
      _
    $region3: #{tpu_custom_call.1} parent=1 // pred_check_branch
      %9 = sbr.rel (0) target = $region5
    $region4: #{tpu_custom_call.1} parent=1 // pred_region
      %s11 = ssub.s32 256, 256
      %12 = vsyncadd [#allocation3], %s11
      %s13 = sshll.u32 [#allocation2], 4
      %s14 = int_to_ptr.vmem [resolvable:$true] %s13
      %19 = dma.hbm_to_vmem [thread:$0]  %s0, 256, %s14, [#allocation3], 64, 64, 4
    $region5: #{tpu_custom_call.1} parent=1 // pred_fallthru
      _
    // Predicated region
    $region6: #{tpu_custom_call.1} parent=1 // pred_check
      _
    $region7: #{tpu_custom_call.1} parent=1 // pred_check_branch
      %21 = sbr.rel (0) target = $region9
    $region8: #{tpu_custom_call.1} parent=1 // pred_region
      %22 = dma.done [#allocation3], 256
    $region9: #{tpu_custom_call.1} parent=1 // pred_fallthru
      _
    %v23 = vld [vmem:[#allocation2] ss:$2 sm:$0x3]
    %s24 = scalar_lea.vmem [#allocation2], 4
    %v25 = vld [vmem:[%s24] ss:$2 sm:$0x3]
    %s26 = scalar_lea.vmem [#allocation2], 8
    %v27 = vld [vmem:[%s26] ss:$2 sm:$0x3]
    %s28 = scalar_lea.vmem [#allocation2], 12
    %v29 = vld [vmem:[%s28] ss:$2 sm:$0x3]
    %v34 = vcombine.low %v23, %v25
    %v36 = vunpack.c.l.s4 1935823168
    %v37 = vunpack.c.0.s8 %v36
    %v38 = vlaneseq
    %v39 = vshrl.u32 %v38, 7
    %v40 = vsub.s32 %v37, %v39
    %v41 = vrot.slane %v34, %v40
    %v42 = vcombine.low %v27, %v29
    %v44 = vunpack.c.l.s4 1935823168
    %v45 = vunpack.c.0.s8 %v44
    %v46 = vlaneseq
    %v47 = vshrl.u32 %v46, 7
    %v48 = vsub.s32 %v45, %v47
    %v49 = vrot.slane %v42, %v48
    %52 = vst [vmem:[#allocation5] sm:$0xf] %v41
    %53 = vst [vmem:[#allocation5 + $0x8] sm:$0xf] %v49
    %s54 = scalar_lea.vmem [#allocation2], 1
    %v55 = vld [vmem:[%s54] ss:$2 sm:$0x3]
    %s56 = scalar_lea.vmem [#allocation2], 5
    %v57 = vld [vmem:[%s56] ss:$2 sm:$0x3]
    %s58 = scalar_lea.vmem [#allocation2], 9
    %v59 = vld [vmem:[%s58] ss:$2 sm:$0x3]
    %s60 = scalar_lea.vmem [#allocation2], 13
    %v61 = vld [vmem:[%s60] ss:$2 sm:$0x3]
    %v66 = vcombine.low %v55, %v57
    %v68 = vunpack.c.l.s4 1935823168
    %v69 = vunpack.c.0.s8 %v68
    %v70 = vlaneseq
    %v71 = vshrl.u32 %v70, 7
    %v72 = vsub.s32 %v69, %v71
    %v73 = vrot.slane %v66, %v72
    %v74 = vcombine.low %v59, %v61
    %v76 = vunpack.c.l.s4 1935823168
    %v77 = vunpack.c.0.s8 %v76
    %v78 = vlaneseq
    %v79 = vshrl.u32 %v78, 7
    %v80 = vsub.s32 %v77, %v79
    %v81 = vrot.slane %v74, %v80
    %s84 = scalar_lea.vmem [#allocation5], 4
    %85 = vst [vmem:[%s84] sm:$0xf] %v73
    %86 = vst [vmem:[%s84 + $0x8] sm:$0xf] %v81
    // Predicated region
    $region10: #{tpu_custom_call.1} parent=1 // pred_check
      _
    $region11: #{tpu_custom_call.1} parent=1 // pred_check_branch
      %88 = sbr.rel (0) target = $region13
    $region12: #{tpu_custom_call.1} parent=1 // pred_region
      %s90 = ssub.s32 256, 256
      %91 = vsyncadd [#allocation4], %s90
      %s92 = sshll.u32 [#allocation5], 4
      %s93 = int_to_ptr.vmem [resolvable:$true] %s92
      %98 = dma.vmem_to_hbm [thread:$0]  %s93, 256, %s1, [#allocation4], 64, 64, 4
    $region13: #{tpu_custom_call.1} parent=1 // pred_fallthru
      _
    // Predicated region
    $region14: #{tpu_custom_call.1} parent=1 // pred_check
      _
    $region15: #{tpu_custom_call.1} parent=1 // pred_check_branch
      %100 = sbr.rel (0) target = $region17
    $region16: #{tpu_custom_call.1} parent=1 // pred_region
      %101 = dma.done [#allocation4], 256
    $region17: #{tpu_custom_call.1} parent=1 // pred_fallthru
      _
    %102 = vsyncpa [#allocation3], 1
    %103 = vsyncpa [#allocation4], 1

</llo_original>
